<compile_context>
chip_gen: v6e
topology: v6e:2x2x1
jax: 0.10.0
libtpu: 0.0.40
codegen_flags: <defaults>
</compile_context>

<pallas_src>
import functools
import math

import jax
import jax.numpy as jnp
from jax.experimental import pallas as pl
from jax.experimental.pallas import tpu as pltpu


# ---------------------------------------------------------------------------
# Pallas kernel: KxK conv (stride 1 or 2) + bias + optional FusedLeakyReLU
# ---------------------------------------------------------------------------
def _conv_act_kernel(x_ref, w_ref, b_ref, o_ref, *, K, stride, Hq, Wo, row_tile,
                     activate, neg_slope=0.2, act_gain=math.sqrt(2.0)):
    """One (batch, row-tile) grid step.

    x_ref : (stride*stride*Hq, Wq, IC)  padded, parity-decomposed input (resident per batch)
    w_ref : (K*K, IC, OC)               scaled weights, tap-major (resident across the grid)
    b_ref : (1, OC)                     bias (zeros if the layer has none), f32
    o_ref : (row_tile*Wo, OC)           output tile: pixels on sublanes, channels on lanes
    """
    t = pl.program_id(1)
    row0 = t * row_tile
    ic = x_ref.shape[-1]
    oc = o_ref.shape[-1]

    acc = jnp.zeros((row_tile * Wo, oc), jnp.float32)
    # K*K accumulated matmuls over shifted windows -- no im2col materialization.
    for kh in range(K):
        for kw in range(K):
            par = (kh % stride) * stride + (kw % stride)     # parity image index
            h0 = par * Hq + kh // stride                      # static row offset
            xs = x_ref[pl.ds(h0 + row0, row_tile), pl.ds(kw // stride, Wo), :]
            xs = xs.reshape(row_tile * Wo, ic)
            acc = acc + jnp.dot(xs, w_ref[kh * K + kw],
                                preferred_element_type=jnp.float32)

    acc = acc + b_ref[...]
    if activate:                                              # FusedLeakyReLU
        acc = jnp.where(acc >= 0.0, acc, acc * neg_slope) * act_gain
    o_ref[...] = acc.astype(o_ref.dtype)


def _pick_row_tile(Ho, Wo, OC, out_itemsize):
    """Largest divisor of Ho whose output tile is <= ~2 MiB (lane-dense, >=1 pipeline step)."""
    target_rows = max(1, (2 * 1024 * 1024) // max(1, Wo * OC * out_itemsize))
    if Ho <= target_rows:
        return Ho
    for cand in range(min(Ho - 1, target_rows), 0, -1):
        if Ho % cand == 0 and (cand * Wo) % 8 == 0:
            return cand
    return Ho


def conv2d_act(x, weight_eff, bias, *, stride, pad, activate,
               compute_dtype=jnp.bfloat16, out_dtype=None):
    """Conv2d(+bias, +FusedLeakyReLU) on NHWC activations.

    x          : (B, H, W, IC)
    weight_eff : (OC, IC, K, K) ALREADY scaled (EqualConv scale, possibly blur-fused)
    bias       : (OC,) or None
    pad        : (lo, hi) zero padding applied to both spatial dims
    """
    B, H, W, IC = x.shape
    OC, IC2, K, K2 = weight_eff.shape
    assert IC2 == IC and K2 == K
    out_dtype = out_dtype if out_dtype is not None else x.dtype
    s = stride
    p0, p1 = pad
    Hp, Wp = H + p0 + p1, W + p0 + p1
    Ho = (Hp - K) // s + 1
    Wo = (Wp - K) // s + 1

    # Pad, then space-to-depth (parity) split so stride-2 taps become contiguous slices.
    Hpe = -(-Hp // s) * s
    Wpe = -(-Wp // s) * s
    xp = jnp.pad(x, ((0, 0), (p0, p1 + Hpe - Hp), (p0, p1 + Wpe - Wp), (0, 0)))
    Hq, Wq = Hpe // s, Wpe // s
    xps = xp.reshape(B, Hq, s, Wq, s, IC).transpose(0, 2, 4, 1, 3, 5)
    xps = xps.reshape(B, s * s * Hq, Wq, IC).astype(compute_dtype)

    w_taps = jnp.transpose(weight_eff, (2, 3, 1, 0)).reshape(K * K, IC, OC)
    w_taps = w_taps.astype(compute_dtype)
    if bias is None:
        bias = jnp.zeros((OC,), jnp.float32)
    b2d = bias.reshape(1, OC).astype(jnp.float32)

    out_itemsize = jnp.dtype(out_dtype).itemsize
    row_tile = _pick_row_tile(Ho, Wo, OC, out_itemsize)
    n_tiles = Ho // row_tile

    kernel = functools.partial(
        _conv_act_kernel, K=K, stride=s, Hq=Hq, Wo=Wo, row_tile=row_tile,
        activate=activate)

    cost = pl.CostEstimate(
        flops=int(2 * B * Ho * Wo * OC * IC * K * K),
        transcendentals=0,
        bytes_accessed=int(xps.size * jnp.dtype(compute_dtype).itemsize
                           + w_taps.size * jnp.dtype(compute_dtype).itemsize
                           + B * Ho * Wo * OC * out_itemsize),
    )

    out = pl.pallas_call(
        kernel,
        out_shape=jax.ShapeDtypeStruct((B, Ho * Wo, OC), out_dtype),
        grid_spec=pltpu.PrefetchScalarGridSpec(
            num_scalar_prefetch=0,
            grid=(B, n_tiles),
            in_specs=[
                pl.BlockSpec((None, s * s * Hq, Wq, IC), lambda b, t: (b, 0, 0, 0)),
                pl.BlockSpec((K * K, IC, OC), lambda b, t: (0, 0, 0)),
                pl.BlockSpec((1, OC), lambda b, t: (0, 0)),
            ],
            out_specs=pl.BlockSpec((None, row_tile * Wo, OC), lambda b, t: (b, t, 0)),
        ),
        compiler_params=pltpu.CompilerParams(
            dimension_semantics=("parallel", "parallel"),
            vmem_limit_bytes=64 * 1024 * 1024,
        ),
        cost_estimate=cost,
    )(xps, w_taps, b2d)

    return out.reshape(B, Ho, Wo, OC)


# ---------------------------------------------------------------------------
# Pallas kernel: fused final_linear  (EqualLinear + fused_lrelu + EqualLinear)
# ---------------------------------------------------------------------------
def _final_linear_kernel(x_ref, w1_ref, b1_ref, w2_ref, b2_ref, o_ref):
    h = jnp.dot(x_ref[...], w1_ref[...], preferred_element_type=jnp.float32) + b1_ref[...]
    h = jnp.where(h >= 0.0, h, 0.2 * h) * math.sqrt(2.0)          # fused_leaky_relu
    o_ref[...] = (jnp.dot(h, w2_ref[...], preferred_element_type=jnp.float32)
                  + b2_ref[...]).astype(o_ref.dtype)


def final_linear_pallas(x_flat, w1, b1, w2, b2, *, compute_dtype=jnp.bfloat16):
    B, Fin = x_flat.shape
    C = w1.shape[0]
    w1t = (w1 * (1.0 / math.sqrt(Fin))).T.astype(compute_dtype)   # (Fin, C)
    w2t = (w2 * (1.0 / math.sqrt(C))).T.astype(jnp.float32)       # (C, 1)
    return pl.pallas_call(
        _final_linear_kernel,
        out_shape=jax.ShapeDtypeStruct((B, 1), jnp.float32),
    )(x_flat.astype(compute_dtype), w1t,
      b1.reshape(1, C).astype(jnp.float32), w2t,
      b2.reshape(1, 1).astype(jnp.float32))


# ---------------------------------------------------------------------------
# Weight helpers (trace-time, tiny)
# ---------------------------------------------------------------------------
def make_blur_kernel(k=(1, 3, 3, 1)):
    k = jnp.asarray(k, jnp.float32)
    k = k[None, :] * k[:, None]
    return k / jnp.sum(k)


def equal_conv_weight(w):
    OC, IC, K, _ = w.shape
    return w * (1.0 / math.sqrt(IC * K * K))


def fuse_blur_into_conv(w_scaled, blur_k):
    """Compose Blur (upfirdn2d, symmetric kernel) with the following conv:
    (x * k) * w  ==  x * (k full-conv w)."""
    OC, IC, K, _ = w_scaled.shape
    Kb = blur_k.shape[0]
    Keff = K + Kb - 1
    w_comb = jnp.zeros((OC, IC, Keff, Keff), jnp.float32)
    for a in range(K):
        for b in range(K):
            w_comb = w_comb.at[:, :, a:a + Kb, b:b + Kb].add(
                w_scaled[:, :, a, b][:, :, None, None] * blur_k[None, None, :, :])
    return w_comb


# ---------------------------------------------------------------------------
# Plain-JAX glue (tiny): minibatch stddev feature
# ---------------------------------------------------------------------------
def minibatch_stddev_nhwc(x, group_size=4, feat=1):
    B, H, W, C = x.shape
    G = min(B, group_size)
    M = B // G
    y = x.astype(jnp.float32).reshape(G, M, H, W, feat, C // feat)
    std = jnp.sqrt(jnp.var(y, axis=0) + 1e-8)                 # (M, H, W, feat, C//feat)
    sm = jnp.mean(std, axis=(1, 2, 4))                        # (M, feat)
    sm = jnp.tile(sm.reshape(M, 1, 1, feat), (G, H, W, 1))    # (B, H, W, feat)
    return jnp.concatenate([x, sm.astype(x.dtype)], axis=-1)


# ---------------------------------------------------------------------------
# Parameters (shapes mirror the PyTorch module)
# ---------------------------------------------------------------------------
def init_discriminator_params(key, size, im_channel=3, channel_multiplier=2, channels=None):
    cm = channel_multiplier
    if channels is None:
        channels = {4: 512, 8: 512, 16: 512, 32: 512, 64: 256 * cm, 128: 128 * cm,
                    256: 64 * cm, 512: 32 * cm, 1024: 16 * cm}
    log_size = int(math.log2(size))
    keys = iter(jax.random.split(key, 64))

    def normal(shape):
        return jax.random.normal(next(keys), shape, jnp.float32)

    # NOTE: the PyTorch module initializes biases to zero; we use small random biases here
    # so that the fused bias path is numerically exercised by the check below.
    def bias(n):
        return 0.1 * jax.random.normal(next(keys), (n,), jnp.float32)

    params = {}
    c0 = channels[size]
    params["conv0_w"] = normal((c0, im_channel, 1, 1))
    params["conv0_b"] = bias(c0)                       # FusedLeakyReLU bias

    blocks = []
    in_ch = c0
    for i in range(log_size, 2, -1):
        out_ch = channels[2 ** (i - 1)]
        blocks.append({
            "conv1_w": normal((in_ch, in_ch, 3, 3)),
            "conv1_b": bias(in_ch),
            "conv2_w": normal((out_ch, in_ch, 3, 3)),
            "conv2_b": bias(out_ch),
            "skip_w": normal((out_ch, in_ch, 1, 1)),   # bias=False, activate=False
        })
        in_ch = out_ch
    params["blocks"] = blocks

    c4 = channels[4]
    params["final_conv_w"] = normal((c4, in_ch + 1, 3, 3))
    params["final_conv_b"] = bias(c4)
    params["fl1_w"] = normal((c4, c4 * 4 * 4))
    params["fl1_b"] = bias(c4)
    params["fl2_w"] = normal((1, c4))
    params["fl2_b"] = bias(1)
    return params


# ---------------------------------------------------------------------------
# Discriminator forward (Pallas path)
# ---------------------------------------------------------------------------
def discriminator_forward_pallas(params, x_nchw, *, compute_dtype=jnp.bfloat16,
                                 act_dtype=jnp.bfloat16):
    blur_k = make_blur_kernel((1, 3, 3, 1))
    B = x_nchw.shape[0]
    x = jnp.transpose(x_nchw, (0, 2, 3, 1)).astype(act_dtype)   # NHWC

    # convs[0]: ConvLayer(im_channel, C, 1) = EqualConv2d(1x1) + FusedLeakyReLU
    x = conv2d_act(x, equal_conv_weight(params["conv0_w"]), params["conv0_b"],
                   stride=1, pad=(0, 0), activate=True,
                   compute_dtype=compute_dtype, out_dtype=act_dtype)

    for blk in params["blocks"]:                                # ResBlocks
        # conv1: 3x3, stride 1, pad 1 (+ fused lrelu)
        y = conv2d_act(x, equal_conv_weight(blk["conv1_w"]), blk["conv1_b"],
                       stride=1, pad=(1, 1), activate=True,
                       compute_dtype=compute_dtype, out_dtype=act_dtype)
        # conv2: Blur(pad=(2,2)) + 3x3 stride-2 conv  -> ONE fused 6x6 stride-2 conv
        w2 = fuse_blur_into_conv(equal_conv_weight(blk["conv2_w"]), blur_k)
        y = conv2d_act(y, w2, blk["conv2_b"], stride=2, pad=(2, 2), activate=True,
                       compute_dtype=compute_dtype, out_dtype=act_dtype)
        # skip: Blur(pad=(1,1)) + 1x1 stride-2 conv   -> ONE fused 4x4 stride-2 conv
        ws = fuse_blur_into_conv(equal_conv_weight(blk["skip_w"]), blur_k)
        skip = conv2d_act(x, ws, None, stride=2, pad=(1, 1), activate=False,
                          compute_dtype=compute_dtype, out_dtype=act_dtype)
        x = ((y.astype(jnp.float32) + skip.astype(jnp.float32))
             * (1.0 / math.sqrt(2.0))).astype(act_dtype)

    # minibatch stddev feature (plain-JAX glue)
    x = minibatch_stddev_nhwc(x, group_size=4, feat=1)

    # final_conv: 3x3 stride 1 pad 1 + fused lrelu
    x = conv2d_act(x, equal_conv_weight(params["final_conv_w"]), params["final_conv_b"],
                   stride=1, pad=(1, 1), activate=True,
                   compute_dtype=compute_dtype, out_dtype=act_dtype)

    # flatten in NCHW order (matches torch's out.view(batch, -1))
    x_flat = jnp.transpose(x, (0, 3, 1, 2)).reshape(B, -1)

    # final_linear: EqualLinear(+fused_lrelu) -> EqualLinear  (one fused Pallas kernel)
    return final_linear_pallas(x_flat, params["fl1_w"], params["fl1_b"],
                               params["fl2_w"], params["fl2_b"],
                               compute_dtype=compute_dtype)


# ---------------------------------------------------------------------------
# Pure-JAX f32 reference mirroring the PyTorch forward (for validation)
# ---------------------------------------------------------------------------
def _ref_fused_leaky_relu(x, bias):
    x = x + bias.reshape(1, -1, 1, 1)
    return jnp.where(x >= 0.0, x, 0.2 * x) * math.sqrt(2.0)


def _ref_equal_conv2d(x, w, stride, padding, bias=None):
    OC, IC, K, _ = w.shape
    scale = 1.0 / math.sqrt(IC * K * K)
    out = jax.lax.conv_general_dilated(
        x, w * scale, window_strides=(stride, stride),
        padding=[(padding, padding), (padding, padding)],
        dimension_numbers=("NCHW", "OIHW", "NCHW"),
        precision=jax.lax.Precision.HIGHEST)
    if bias is not None:
        out = out + bias.reshape(1, -1, 1, 1)
    return out


def _ref_blur(x, blur_k, pad):
    B, C, H, W = x.shape
    xp = jnp.pad(x, ((0, 0), (0, 0), (pad[0], pad[1]), (pad[0], pad[1])))
    w = jnp.tile(blur_k[::-1, ::-1][None, None], (C, 1, 1, 1))   # flipped kernel (symmetric)
    return jax.lax.conv_general_dilated(
        xp, w, window_strides=(1, 1), padding=[(0, 0), (0, 0)],
        dimension_numbers=("NCHW", "OIHW", "NCHW"), feature_group_count=C,
        precision=jax.lax.Precision.HIGHEST)


def discriminator_forward_reference(params, x):
    blur_k = make_blur_kernel((1, 3, 3, 1))
    out = _ref_equal_conv2d(x, params["conv0_w"], 1, 0)
    out = _ref_fused_leaky_relu(out, params["conv0_b"])
    for blk in params["blocks"]:
        y = _ref_equal_conv2d(out, blk["conv1_w"], 1, 1)
        y = _ref_fused_leaky_relu(y, blk["conv1_b"])
        y = _ref_blur(y, blur_k, (2, 2))
        y = _ref_equal_conv2d(y, blk["conv2_w"], 2, 0)
        y = _ref_fused_leaky_relu(y, blk["conv2_b"])
        s = _ref_blur(out, blur_k, (1, 1))
        s = _ref_equal_conv2d(s, blk["skip_w"], 2, 0)
        out = (y + s) / math.sqrt(2.0)

    batch, channel, height, width = out.shape
    group = min(batch, 4)
    feat = 1
    stddev = out.reshape(group, -1, feat, channel // feat, height, width)
    stddev = jnp.sqrt(jnp.var(stddev, axis=0) + 1e-8)
    stddev = jnp.mean(stddev, axis=(2, 3, 4), keepdims=True)
    stddev = jnp.squeeze(stddev, axis=2)
    stddev = jnp.tile(stddev, (group, 1, height, width))
    out = jnp.concatenate([out, stddev], axis=1)

    out = _ref_equal_conv2d(out, params["final_conv_w"], 1, 1)
    out = _ref_fused_leaky_relu(out, params["final_conv_b"])
    out = out.reshape(batch, -1)

    h = jnp.dot(out, (params["fl1_w"] * (1.0 / math.sqrt(out.shape[1]))).T,
                precision=jax.lax.Precision.HIGHEST)
    h = h + params["fl1_b"].reshape(1, -1)
    h = jnp.where(h >= 0.0, h, 0.2 * h) * math.sqrt(2.0)
    o = jnp.dot(h, (params["fl2_w"] * (1.0 / math.sqrt(h.shape[1]))).T,
                precision=jax.lax.Precision.HIGHEST) + params["fl2_b"].reshape(1, -1)
    return o


# ---------------------------------------------------------------------------
if __name__ == "__main__":
    size = 16          # input resolution (power of two); spatial: 16 -> 8 -> 4
    batch = 4          # divisible by stddev_group
    im_channel = 3
    # Small channel table for the test (the real module uses 512 at these resolutions).
    channels = {16: 32, 8: 32, 4: 32}

    key = jax.random.PRNGKey(0)
    kp, kx = jax.random.split(key)
    params = init_discriminator_params(kp, size, im_channel=im_channel, channels=channels)
    x = jax.random.normal(kx, (batch, im_channel, size, size), jnp.float32)

    out = discriminator_forward_pallas(params, x)       # bf16 operands, f32 accumulation
    out = jax.block_until_ready(out)
    assert out.shape == (batch, 1)
    assert bool(jnp.all(jnp.isfinite(out)))

    ref = discriminator_forward_reference(params, x)    # f32 PyTorch-faithful reference
    err = float(jnp.max(jnp.abs(out - ref)))
    ref_scale = float(jnp.max(jnp.abs(ref)))
    assert err <= 0.1 * max(ref_scale, 1.0), f"max abs err {err} vs ref scale {ref_scale}"

    print("KERNEL_OK")
</pallas_src>

<mosaic_0001>
module attributes {stable_mosaic.version = 11 : i64} {
  func.func @_conv_act_kernel(%arg0: i32, %arg1: i32, %arg2: memref<1x16x16x3xbf16, #tpu.memory_space<vmem>>, %arg3: memref<1x3x32xbf16, #tpu.memory_space<vmem>>, %arg4: memref<1x32xf32, #tpu.memory_space<vmem>>, %arg5: memref<1x256x32xbf16, #tpu.memory_space<vmem>>) attributes {dimension_semantics = [#tpu.dimension_semantics<parallel>, #tpu.dimension_semantics<parallel>], iteration_bounds = array<i64: 4, 1>, scalar_prefetch = 0 : i64, scratch_operands = 0 : i64, tpu.core_type = #tpu.core_type<tc>, window_params = [{transform_indices = @transform_0, window_bounds = array<i64: 1, 16, 16, 3>}, {pipeline_mode = #tpu.pipeline_mode<synchronous>, transform_indices = @transform_1, window_bounds = array<i64: 1, 3, 32>}, {pipeline_mode = #tpu.pipeline_mode<synchronous>, transform_indices = @transform_2, window_bounds = array<i64: 1, 32>}, {transform_indices = @transform_3, window_bounds = array<i64: 1, 256, 32>}]} {
    %c16_i32 = arith.constant 16 : i32
    %0 = arith.muli %arg1, %c16_i32 : i32
    %cst = arith.constant 0.000000e+00 : f32
    %1 = vector.broadcast %cst : f32 to vector<256x32xf32>
    %c0_i32 = arith.constant 0 : i32
    %2 = arith.addi %c0_i32, %0 : i32
    %c0 = arith.constant 0 : index
    %3 = arith.index_cast %2 : i32 to index
    %c0_0 = arith.constant 0 : index
    %c0_1 = arith.constant 0 : index
    %4 = vector.load %arg2[%c0, %3, %c0_0, %c0_1] : memref<1x16x16x3xbf16, #tpu.memory_space<vmem>>, vector<1x16x16x3xbf16>
    %5 = vector.shape_cast %4 : vector<1x16x16x3xbf16> to vector<16x16x3xbf16>
    %6 = vector.shape_cast %5 : vector<16x16x3xbf16> to vector<256x3xbf16>
    %c0_2 = arith.constant 0 : index
    %c0_3 = arith.constant 0 : index
    %c0_4 = arith.constant 0 : index
    %7 = vector.load %arg3[%c0_2, %c0_3, %c0_4] : memref<1x3x32xbf16, #tpu.memory_space<vmem>>, vector<1x3x32xbf16>
    %8 = vector.shape_cast %7 : vector<1x3x32xbf16> to vector<3x32xbf16>
    %cst_5 = arith.constant dense<0.000000e+00> : vector<256x32xf32>
    %9 = tpu.matmul %6, %8, %cst_5 {dimension_numbers = #tpu.dot_dimension_numbers<[1], [0], [0], [1], [0, 0, 1, 1], [], []>} : vector<256x3xbf16>, vector<3x32xbf16>, vector<256x32xf32> -> vector<256x32xf32>
    %10 = arith.addf %1, %9 : vector<256x32xf32>
    %c0_6 = arith.constant 0 : index
    %c0_7 = arith.constant 0 : index
    %11 = vector.load %arg4[%c0_6, %c0_7] : memref<1x32xf32, #tpu.memory_space<vmem>>, vector<1x32xf32>
    %12 = vector.broadcast %11 : vector<1x32xf32> to vector<256x32xf32>
    %13 = arith.addf %10, %12 : vector<256x32xf32>
    %cst_8 = arith.constant 0.000000e+00 : f32
    %14 = vector.broadcast %cst_8 : f32 to vector<256x32xf32>
    %15 = arith.cmpf oge, %13, %14 : vector<256x32xf32>
    %cst_9 = arith.constant 2.000000e-01 : f32
    %16 = vector.broadcast %cst_9 : f32 to vector<256x32xf32>
    %17 = arith.mulf %13, %16 : vector<256x32xf32>
    %18 = arith.select %15, %13, %17 : vector<256x32xi1>, vector<256x32xf32>
    %cst_10 = arith.constant 1.41421354 : f32
    %19 = vector.broadcast %cst_10 : f32 to vector<256x32xf32>
    %20 = arith.mulf %18, %19 : vector<256x32xf32>
    %21 = arith.truncf %20 : vector<256x32xf32> to vector<256x32xbf16>
    %c0_11 = arith.constant 0 : index
    %c0_12 = arith.constant 0 : index
    %c0_13 = arith.constant 0 : index
    %22 = vector.load %arg5[%c0_11, %c0_12, %c0_13] : memref<1x256x32xbf16, #tpu.memory_space<vmem>>, vector<1x256x32xbf16>
    %23 = vector.shape_cast %22 : vector<1x256x32xbf16> to vector<256x32xbf16>
    %24 = vector.shape_cast %21 : vector<256x32xbf16> to vector<1x256x32xbf16>
    tpu.vector_store %arg5[%c0_11, %c0_12, %c0_13], %24 {strides = array<i32>} : memref<1x256x32xbf16, #tpu.memory_space<vmem>>, vector<1x256x32xbf16>,
    return
  }
  func.func @transform_0(%arg0: i32, %arg1: i32) -> (i32, i32, i32, i32) {
    %c0_i32 = arith.constant 0 : i32
    %c0_i32_0 = arith.constant 0 : i32
    %c0_i32_1 = arith.constant 0 : i32
    %c0_i32_2 = arith.constant 0 : i32
    return %arg0, %c0_i32, %c0_i32_0, %c0_i32_1 : i32, i32, i32, i32
  }
  func.func @transform_1(%arg0: i32, %arg1: i32) -> (i32, i32, i32) {
    %c0_i32 = arith.constant 0 : i32
    %c0_i32_0 = arith.constant 0 : i32
    %c0_i32_1 = arith.constant 0 : i32
    %c0_i32_2 = arith.constant 0 : i32
    return %c0_i32, %c0_i32_0, %c0_i32_1 : i32, i32, i32
  }
  func.func @transform_2(%arg0: i32, %arg1: i32) -> (i32, i32) {
    %c0_i32 = arith.constant 0 : i32
    %c0_i32_0 = arith.constant 0 : i32
    %c0_i32_1 = arith.constant 0 : i32
    return %c0_i32, %c0_i32_0 : i32, i32
  }
  func.func @transform_3(%arg0: i32, %arg1: i32) -> (i32, i32, i32) {
    %c0_i32 = arith.constant 0 : i32
    %c0_i32_0 = arith.constant 0 : i32
    return %arg0, %arg1, %c0_i32 : i32, i32, i32
  }
}

</mosaic_0001>

<llo_original>
// kernel: tpu_custom_call.1
$region0: #{tpu_custom_call.1}
  #allocation0 [shape = 'u32[]', space=smem, size = 0x4, offset = 0x4, fixed_abs, tag = 'smem constant byte address 0x4 - core index']
  #allocation1 [shape = 'u32[144,128]{1,0:T(1,128)}', space=vmem, size = 0x12000, scoped, tag = 'internal scratch']
  %s0 = inlined_call_operand.vmem [shape: bf16[4,16,16,3], index: 0, kind: input, shape index: {}]
  %s1 = inlined_call_operand.vmem [shape: bf16[1,3,32], index: 1, kind: input, shape index: {}]
  %s2 = inlined_call_operand.vmem [shape: f32[1,32], index: 2, kind: input, shape index: {}]
  %s3 = inlined_call_operand.vmem [shape: bf16[4,256,32], index: 3, kind: output, shape index: {}]
  %s4 = sld [smem:[#allocation0]]
  $region45: #{tpu_custom_call.1} parent=0
    _
  %s6 = ssub.s32 1, %s4
  %s7 = scalar_select 0, %s6, %s4
  loop: start=0, step=1, limit=6
  $region2: #{tpu_custom_call.1} parent=0 // loop_pre_header
    _
  $region3: #{tpu_custom_call.1} parent=0 // loop_header
    %s9 = sphi 0, %s13
    %p10 = scmp.ge.s32.totalorder %s9, 6
    %s16 = sphi 0, %s28
    %s17 = sphi 0, %s24
    %s18 = sphi 0, %s16
    %s19 = sphi 0, %s17
    %s20 = sphi 0, %s18
    %s21 = sphi 0, %s19
    %s31 = sphi 0, %s33
    %s34 = sphi 0, %s31
    %s35 = sphi 0, %s34
    %s51 = sphi 0, %s35
    %s55 = sphi 0, %s55
    %s57 = sphi 0, %s55
    %s58 = sphi 0, %s57
    %s72 = sphi 0, %s58
    %s76 = sphi 0, %s76
    %s78 = sphi 0, %s76
    %s79 = sphi 0, %s78
    %s93 = sphi 0, %s79
    %s101 = sphi 0, %s103
    %s104 = sphi 0, %s101
    %s105 = sphi 0, %s104
    %s121 = sphi 0, %s105
  $region4: #{tpu_custom_call.1} parent=0 // loop_header_branch
    %12 = sbr.rel (%p10) target = $region8
  $region5: #{tpu_custom_call.1} parent=0 // loop_body
    %s14 = ssub.s32 %s9, 1
    %s15 = ssub.s32 %s9, 2
    %s22 = sadd.s32 1, %s17
    %p23 = scmp.ge.s32.totalorder %s22, 1
    %s24 = scalar_select %p23, 0, %s22
    %s25 = sadd.s32 1, %s16
    %s26 = scalar_select %p23, %s25, %s16
    %p27 = scmp.ge.s32.totalorder %s26, 4
    %s28 = scalar_select %p27, 0, %s26
    %s29 = ssub.s32 %s16, %s28
    %p30 = scmp.eq.s32.totalorder %s29, 0
    %s32 = sadd.s32 %s31, 1
    %s33 = scalar_select %p30, %s31, %s32
    %p36 = pneg %p30
    %p37 = scmp.eq.s32.totalorder %s9, 3
    %p38 = por %p36, %p37
    %p39 = scmp.ne.s32.totalorder %s31, %s34
    %p40 = scmp.eq.s32.totalorder %s9, 0
    %p41 = por %p39, %p40
    %p42 = scmp.ne.s32.totalorder %s31, %s34
    %p43 = scmp.eq.s32.totalorder %s14, 3
    %p44 = por %p42, %p43
    %p45 = scmp.ne.s32.totalorder %s34, %s35
    %p46 = scmp.eq.s32.totalorder %s14, 0
    %p47 = por %p45, %p46
    %p48 = scmp.ne.s32.totalorder %s34, %s35
    %p49 = scmp.eq.s32.totalorder %s15, 3
    %p50 = por %p48, %p49
    %p52 = scmp.ne.s32.totalorder %s35, %s51
    %p53 = scmp.eq.s32.totalorder %s15, 0
    %p54 = por %p52, %p53
    %s56 = sadd.s32 %s55, 1
    %p59 = scmp.eq.s32.totalorder %s9, 3
    %p60 = scmp.ne.s32.totalorder %s55, %s57
    %p61 = scmp.eq.s32.totalorder %s9, 0
    %p62 = por %p60, %p61
    %p63 = scmp.ne.s32.totalorder %s55, %s57
    %p64 = scmp.eq.s32.totalorder %s14, 3
    %p65 = por %p63, %p64
    %p66 = scmp.ne.s32.totalorder %s57, %s58
    %p67 = scmp.eq.s32.totalorder %s14, 0
    %p68 = por %p66, %p67
    %p69 = scmp.ne.s32.totalorder %s57, %s58
    %p70 = scmp.eq.s32.totalorder %s15, 3
    %p71 = por %p69, %p70
    %p73 = scmp.ne.s32.totalorder %s58, %s72
    %p74 = scmp.eq.s32.totalorder %s15, 0
    %p75 = por %p73, %p74
    %s77 = sadd.s32 %s76, 1
    %p80 = scmp.eq.s32.totalorder %s9, 3
    %p81 = scmp.ne.s32.totalorder %s76, %s78
    %p82 = scmp.eq.s32.totalorder %s9, 0
    %p83 = por %p81, %p82
    %p84 = scmp.ne.s32.totalorder %s76, %s78
    %p85 = scmp.eq.s32.totalorder %s14, 3
    %p86 = por %p84, %p85
    %p87 = scmp.ne.s32.totalorder %s78, %s79
    %p88 = scmp.eq.s32.totalorder %s14, 0
    %p89 = por %p87, %p88
    %p90 = scmp.ne.s32.totalorder %s78, %s79
    %p91 = scmp.eq.s32.totalorder %s15, 3
    %p92 = por %p90, %p91
    %p94 = scmp.ne.s32.totalorder %s79, %s93
    %p95 = scmp.eq.s32.totalorder %s15, 0
    %p96 = por %p94, %p95
    %s97 = ssub.s32 %s16, %s28
    %s98 = ssub.s32 %s17, %s24
    %s99 = sor.u32 %s97, %s98
    %p100 = scmp.eq.s32.totalorder %s99, 0
    %s102 = sadd.s32 %s101, 1
    %s103 = scalar_select %p100, %s101, %s102
    %p106 = pneg %p100
    %p107 = scmp.eq.s32.totalorder %s9, 3
    %p108 = por %p106, %p107
    %p109 = scmp.ne.s32.totalorder %s101, %s104
    %p110 = scmp.eq.s32.totalorder %s9, 0
    %p111 = por %p109, %p110
    %p112 = scmp.ne.s32.totalorder %s101, %s104
    %p113 = scmp.eq.s32.totalorder %s14, 3
    %p114 = por %p112, %p113
    %p115 = scmp.ne.s32.totalorder %s104, %s105
    %p116 = scmp.eq.s32.totalorder %s14, 0
    %p117 = por %p115, %p116
    %p118 = scmp.ne.s32.totalorder %s104, %s105
    %p119 = scmp.eq.s32.totalorder %s15, 3
    %p120 = por %p118, %p119
    %p122 = scmp.ne.s32.totalorder %s105, %s121
    %p123 = scmp.eq.s32.totalorder %s15, 0
    %p124 = por %p122, %p123
    %p125 = scmp.le.s32.totalorder 1, %s9
    %p126 = scmp.lt.s32.totalorder %s9, 5
    %p127 = pnand %p125, %p126
    %p128 = pneg %p127
    // Predicated region
    $region9: #{tpu_custom_call.1} parent=5 // pred_check
      _
    $region10: #{tpu_custom_call.1} parent=5 // pred_check_branch
      %130 = sbr.rel (%p127) target = $region12
    $region11: #{tpu_custom_call.1} parent=5 // pred_region
      %s131 = ssub.s32 %s9, 1
      // Predicated region
      $region13: #{tpu_custom_call.1} parent=11 // pred_check
        %p132 = pneg %p68
      $region14: #{tpu_custom_call.1} parent=11 // pred_check_branch
        %134 = sbr.rel (%p132) target = $region16
      $region15: #{tpu_custom_call.1} parent=11 // pred_region
        _
      $region16: #{tpu_custom_call.1} parent=11 // pred_fallthru
        _
      // Predicated region
      $region17: #{tpu_custom_call.1} parent=11 // pred_check
        %p135 = pneg %p89
      $region18: #{tpu_custom_call.1} parent=11 // pred_check_branch
        %137 = sbr.rel (%p135) target = $region20
      $region19: #{tpu_custom_call.1} parent=11 // pred_region
        _
      $region20: #{tpu_custom_call.1} parent=11 // pred_fallthru
        _
    $region12: #{tpu_custom_call.1} parent=5 // pred_fallthru
      _
    %p138 = scmp.lt.s32.totalorder %s9, 4
    // Predicated region
    $region21: #{tpu_custom_call.1} parent=5 // pred_check
      %p139 = pneg %p138
    $region22: #{tpu_custom_call.1} parent=5 // pred_check_branch
      %141 = sbr.rel (%p139) target = $region24
    $region23: #{tpu_custom_call.1} parent=5 // pred_region
      // Predicated region
      $region25: #{tpu_custom_call.1} parent=23 // pred_check
        %p142 = pneg %p41
      $region26: #{tpu_custom_call.1} parent=23 // pred_check_branch
        %144 = sbr.rel (%p142) target = $region28
      $region27: #{tpu_custom_call.1} parent=23 // pred_region
        %p145 = scmp.lt.s32.totalorder %s16, 3
        %s146 = scalar_select %p145, %s16, 3
        %s147 = smul.addr %s146, 32
        %s148 = smul.addr %s147, 4
        %s149 = scalar_lea.vmem %s0, %s148
      $region28: #{tpu_custom_call.1} parent=23 // pred_fallthru
        _
    $region24: #{tpu_custom_call.1} parent=5 // pred_fallthru
      _
    %p150 = scmp.le.s32.totalorder 1, %s9
    %p151 = scmp.lt.s32.totalorder %s9, 5
    %p152 = pnand %p150, %p151
    %p153 = pneg %p152
    // Predicated region
    $region29: #{tpu_custom_call.1} parent=5 // pred_check
      _
    $region30: #{tpu_custom_call.1} parent=5 // pred_check_branch
      %155 = sbr.rel (%p152) target = $region32
    $region31: #{tpu_custom_call.1} parent=5 // pred_region
      %s156 = ssub.s32 %s9, 1
      %p157 = scmp.lt.s32.totalorder %s18, 3
      %s158 = scalar_select %p157, %s18, 3
      %s159 = smul.addr %s158, 32
      %s160 = smul.addr %s159, 4
      %s161 = scalar_lea.vmem %s0, %s160
      %p162 = pneg %p47
      %p163 = pneg %p44
      %p164 = pneg %p68
      %p165 = pneg %p65
      %p166 = pneg %p89
      %p167 = pneg %p86
      %p168 = pneg %p117
      %p169 = pneg %p114
      %s170 = smul.u32 32, %s19
      %p171 = scmp.lt.s32.totalorder %s18, 3
      %s172 = scalar_select %p171, %s18, 3
      %p173 = scmp.lt.s32.totalorder %s170, 31
      %s174 = scalar_select %p173, %s170, 31
      %s175 = smul.addr %s172, 32
      %s176 = sadd.s32 %s174, %s175
      %s177 = smul.addr %s176, 4
      %s178 = scalar_lea.vmem %s3, %s177
      %p179 = scmp.lt.s32.totalorder %s18, 3
      %s180 = scalar_select %p179, %s18, 3
      %s181 = smul.addr %s180, 32
      %s182 = smul.addr %s181, 4
      %s183 = scalar_lea.vmem %s0, %s182
      %s184 = smul.u32 32, %s19
      %p185 = scmp.lt.s32.totalorder %s18, 3
      %s186 = scalar_select %p185, %s18, 3
      %p187 = scmp.lt.s32.totalorder %s184, 31
      %s188 = scalar_select %p187, %s184, 31
      %s189 = smul.addr %s186, 32
      %s190 = sadd.s32 %s188, %s189
      %s191 = smul.addr %s190, 4
      %s192 = scalar_lea.vmem %s3, %s191
      %s193 = smul.u32 32, %s19
      %s195 = smul.u32 %s19, 16
      %s196 = smul.u32 %s195, 2
      %s197 = smul.addr %s196, 4
      %s198 = scalar_lea.vmem %s183, %s197
      %v199 = vld [vmem:[%s198] sm:$0xf]
      %v200 = vld [vmem:[%s198 + $0x4] sm:$0xf]
      %v201 = vld [vmem:[%s198 + $0x8] sm:$0xf]
      %v202 = vld [vmem:[%s198 + $0xc] sm:$0xf]
      %v203 = vld [vmem:[%s198 + $0x10] sm:$0xf]
      %v204 = vld [vmem:[%s198 + $0x14] sm:$0xf]
      %v205 = vld [vmem:[%s198 + $0x18] sm:$0xf]
      %v206 = vld [vmem:[%s198 + $0x1c] sm:$0xf]
      %v207 = vld [vmem:[%s198 + $0x20] sm:$0xf]
      %v208 = vld [vmem:[%s198 + $0x24] sm:$0xf]
      %v209 = vld [vmem:[%s198 + $0x28] sm:$0xf]
      %v210 = vld [vmem:[%s198 + $0x2c] sm:$0xf]
      %v211 = vld [vmem:[%s198 + $0x30] sm:$0xf]
      %v212 = vld [vmem:[%s198 + $0x34] sm:$0xf]
      %v213 = vld [vmem:[%s198 + $0x38] sm:$0xf]
      %v214 = vld [vmem:[%s198 + $0x3c] sm:$0xf]
      %v215 = vld [vmem:[%s198 + $0x40] sm:$0xf]
      %v216 = vld [vmem:[%s198 + $0x44] sm:$0xf]
      %v217 = vld [vmem:[%s198 + $0x48] sm:$0xf]
      %v218 = vld [vmem:[%s198 + $0x4c] sm:$0xf]
      %v219 = vld [vmem:[%s198 + $0x50] sm:$0xf]
      %v220 = vld [vmem:[%s198 + $0x54] sm:$0xf]
      %v221 = vld [vmem:[%s198 + $0x58] sm:$0xf]
      %v222 = vld [vmem:[%s198 + $0x5c] sm:$0xf]
      %v223 = vld [vmem:[%s198 + $0x60] sm:$0xf]
      %v224 = vld [vmem:[%s198 + $0x64] sm:$0xf]
      %v225 = vld [vmem:[%s198 + $0x68] sm:$0xf]
      %v226 = vld [vmem:[%s198 + $0x6c] sm:$0xf]
      %v227 = vld [vmem:[%s198 + $0x70] sm:$0xf]
      %v228 = vld [vmem:[%s198 + $0x74] sm:$0xf]
      %v229 = vld [vmem:[%s198 + $0x78] sm:$0xf]
      %v230 = vld [vmem:[%s198 + $0x7c] sm:$0xf]
      %v231 = vld [vmem:[%s1] sm:$0x3]
      %v232 = vld [vmem:[%s2] sm:$0x1]
      %v234 = vlaneseq
      %v235 = vshrl.u32 %v234, 7
      %v236 = vsub.s32 0, %v235
      %v237 = vrot.slane %v232, %v236
      %v271 = vunpack.c.l.b16 %v199
      %v272 = vunpack.c.l.b16 %v200
      %v273 = vunpack.c.l.b16 %v201
      %v274 = vunpack.c.l.b16 %v202
      %v275 = vunpack.c.l.b16 %v203
      %v276 = vunpack.c.l.b16 %v204
      %v277 = vunpack.c.l.b16 %v205
      %v278 = vunpack.c.l.b16 %v206
      %v279 = vunpack.c.l.b16 %v207
      %v280 = vunpack.c.l.b16 %v208
      %v281 = vunpack.c.l.b16 %v209
      %v282 = vunpack.c.l.b16 %v210
      %v283 = vunpack.c.l.b16 %v211
      %v284 = vunpack.c.l.b16 %v212
      %v285 = vunpack.c.l.b16 %v213
      %v286 = vunpack.c.l.b16 %v214
      %v287 = vunpack.c.l.b16 %v215
      %v288 = vunpack.c.l.b16 %v216
      %v289 = vunpack.c.l.b16 %v217
      %v290 = vunpack.c.l.b16 %v218
      %v291 = vunpack.c.l.b16 %v219
      %v292 = vunpack.c.l.b16 %v220
      %v293 = vunpack.c.l.b16 %v221
      %v294 = vunpack.c.l.b16 %v222
      %v295 = vunpack.c.l.b16 %v223
      %v296 = vunpack.c.l.b16 %v224
      %v297 = vunpack.c.l.b16 %v225
      %v298 = vunpack.c.l.b16 %v226
      %v299 = vunpack.c.l.b16 %v227
      %v300 = vunpack.c.l.b16 %v228
      %v301 = vunpack.c.l.b16 %v229
      %v302 = vunpack.c.l.b16 %v230
      %v303 = vpack.c.b16 %v272, %v271
      %v304 = vpack.c.b16 %v274, %v273
      %v305 = vpack.c.b16 %v276, %v275
      %v306 = vpack.c.b16 %v278, %v277
      %v307 = vpack.c.b16 %v280, %v279
      %v308 = vpack.c.b16 %v282, %v281
      %v309 = vpack.c.b16 %v284, %v283
      %v310 = vpack.c.b16 %v286, %v285
      %v311 = vpack.c.b16 %v288, %v287
      %v312 = vpack.c.b16 %v290, %v289
      %v313 = vpack.c.b16 %v292, %v291
      %v314 = vpack.c.b16 %v294, %v293
      %v315 = vpack.c.b16 %v296, %v295
      %v316 = vpack.c.b16 %v298, %v297
      %v317 = vpack.c.b16 %v300, %v299
      %v318 = vpack.c.b16 %v302, %v301
      %vm319 = vcmask 23552
      %v321 = vsel %vm319, %v303, 0
      %v324 = vsel %vm319, %v304, 0
      %v327 = vsel %vm319, %v305, 0
      %v330 = vsel %vm319, %v306, 0
      %v333 = vsel %vm319, %v307, 0
      %v336 = vsel %vm319, %v308, 0
      %v339 = vsel %vm319, %v309, 0
      %v342 = vsel %vm319, %v310, 0
      %v345 = vsel %vm319, %v311, 0
      %v348 = vsel %vm319, %v312, 0
      %v351 = vsel %vm319, %v313, 0
      %v354 = vsel %vm319, %v314, 0
      %v357 = vsel %vm319, %v315, 0
      %v360 = vsel %vm319, %v316, 0
      %v363 = vsel %vm319, %v317, 0
      %v366 = vsel %vm319, %v318, 0
      %vm368 = vcmask 1040384
      %vm369 = vcmask 1041408
      %v370 = vsel %vm368, 4294967295, 65535
      %v371 = vsel %vm369, %v370, 0
      %v373 = vand.u32 %v231, %v371
      %375 = vmatprep.subr.bf16.mxu0 0
      %376 = vmatpush1.bf16.msra.mxu0 0
      %377 = vmatprep.subr.bf16.mxu0 0
      %378 = vmatpush1.bf16.msra.mxu0 0
      %379 = vmatprep.subr.bf16.mxu0 0
      %380 = vmatpush1.bf16.msra.mxu0 0
      %381 = vmatprep.subr.bf16.mxu0 0
      %382 = vmatpush1.bf16.msra.mxu0 0
      %383 = vmatprep.subr.bf16.mxu0 0
      %384 = vmatpush1.bf16.msra.mxu0 0
      %385 = vmatprep.subr.bf16.mxu0 0
      %386 = vmatpush1.bf16.msra.mxu0 0
      %387 = vmatprep.subr.bf16.mxu0 0
      %388 = vmatpush1.bf16.msra.mxu0 0
      %389 = vmatprep.subr.bf16.mxu0 0
      %390 = vmatpush1.bf16.msra.mxu0 %v373
      %391 = vmatprep.subr.bf16.mxu0 0
      %392 = vmatpush2.bf16.msra.mxu0 0
      %393 = vmatprep.subr.bf16.mxu0 0
      %394 = vmatpush2.bf16.msra.mxu0 0
      %395 = vmatprep.subr.bf16.mxu0 0
      %396 = vmatpush2.bf16.msra.mxu0 0
      %397 = vmatprep.subr.bf16.mxu0 0
      %398 = vmatpush2.bf16.msra.mxu0 0
      %399 = vmatprep.subr.bf16.mxu0 0
      %400 = vmatpush2.bf16.msra.mxu0 0
      %401 = vmatprep.subr.bf16.mxu0 0
      %402 = vmatpush2.bf16.msra.mxu0 0
      %403 = vmatprep.subr.bf16.mxu0 0
      %404 = vmatpush2.bf16.msra.mxu0 0
      %405 = vmatprep.subr.bf16.mxu0 0
      %406 = vmatpush2.bf16.msra.mxu0 0
      %407 = vmatprep.mubr.bf16.mxu0 0
      %408 = vmatmul.mubr.bf16.gmra.mxu0 %v321
      %v409 = vpop.f32.mrf.mxu0
      %v410 = vadd.f32 %v237, %v409
      %v411 = vpop.f32.mrf.mxu0
      %v412 = vpop.f32.mrf.mxu0
      %v413 = vadd.f32 %v237, %v412
      %v414 = vpop.f32.mrf.mxu0
      %415 = vmatprep.mubr.bf16.mxu0 0
      %416 = vmatmul.mubr.bf16.gmra.mxu0 %v324
      %v417 = vpop.f32.mrf.mxu0
      %v418 = vadd.f32 %v237, %v417
      %v419 = vpop.f32.mrf.mxu0
      %v420 = vpop.f32.mrf.mxu0
      %v421 = vadd.f32 %v237, %v420
      %v422 = vpop.f32.mrf.mxu0
      %423 = vmatprep.mubr.bf16.mxu0 0
      %424 = vmatmul.mubr.bf16.gmra.mxu0 %v327
      %v425 = vpop.f32.mrf.mxu0
      %v426 = vadd.f32 %v237, %v425
      %v427 = vpop.f32.mrf.mxu0
      %v428 = vpop.f32.mrf.mxu0
      %v429 = vadd.f32 %v237, %v428
      %v430 = vpop.f32.mrf.mxu0
      %431 = vmatprep.mubr.bf16.mxu0 0
      %432 = vmatmul.mubr.bf16.gmra.mxu0 %v330
      %v433 = vpop.f32.mrf.mxu0
      %v434 = vadd.f32 %v237, %v433
      %v435 = vpop.f32.mrf.mxu0
      %v436 = vpop.f32.mrf.mxu0
      %v437 = vadd.f32 %v237, %v436
      %v438 = vpop.f32.mrf.mxu0
      %439 = vmatprep.mubr.bf16.mxu0 0
      %440 = vmatmul.mubr.bf16.gmra.mxu0 %v333
      %v441 = vpop.f32.mrf.mxu0
      %v442 = vadd.f32 %v237, %v441
      %v443 = vpop.f32.mrf.mxu0
      %v444 = vpop.f32.mrf.mxu0
      %v445 = vadd.f32 %v237, %v444
      %v446 = vpop.f32.mrf.mxu0
      %447 = vmatprep.mubr.bf16.mxu0 0
      %448 = vmatmul.mubr.bf16.gmra.mxu0 %v336
      %v449 = vpop.f32.mrf.mxu0
      %v450 = vadd.f32 %v237, %v449
      %v451 = vpop.f32.mrf.mxu0
      %v452 = vpop.f32.mrf.mxu0
      %v453 = vadd.f32 %v237, %v452
      %v454 = vpop.f32.mrf.mxu0
      %455 = vmatprep.mubr.bf16.mxu0 0
      %456 = vmatmul.mubr.bf16.gmra.mxu0 %v339
      %v457 = vpop.f32.mrf.mxu0
      %v458 = vadd.f32 %v237, %v457
      %v459 = vpop.f32.mrf.mxu0
      %v460 = vpop.f32.mrf.mxu0
      %v461 = vadd.f32 %v237, %v460
      %v462 = vpop.f32.mrf.mxu0
      %463 = vmatprep.mubr.bf16.mxu0 0
      %464 = vmatmul.mubr.bf16.gmra.mxu0 %v342
      %v465 = vpop.f32.mrf.mxu0
      %v466 = vadd.f32 %v237, %v465
      %v467 = vpop.f32.mrf.mxu0
      %v468 = vpop.f32.mrf.mxu0
      %v469 = vadd.f32 %v237, %v468
      %v470 = vpop.f32.mrf.mxu0
      %471 = vmatprep.mubr.bf16.mxu0 0
      %472 = vmatmul.mubr.bf16.gmra.mxu0 %v345
      %v473 = vpop.f32.mrf.mxu0
      %v474 = vadd.f32 %v237, %v473
      %v475 = vpop.f32.mrf.mxu0
      %v476 = vpop.f32.mrf.mxu0
      %v477 = vadd.f32 %v237, %v476
      %v478 = vpop.f32.mrf.mxu0
      %479 = vmatprep.mubr.bf16.mxu0 0
      %480 = vmatmul.mubr.bf16.gmra.mxu0 %v348
      %v481 = vpop.f32.mrf.mxu0
      %v482 = vadd.f32 %v237, %v481
      %v483 = vpop.f32.mrf.mxu0
      %v484 = vpop.f32.mrf.mxu0
      %v485 = vadd.f32 %v237, %v484
      %v486 = vpop.f32.mrf.mxu0
      %487 = vmatprep.mubr.bf16.mxu0 0
      %488 = vmatmul.mubr.bf16.gmra.mxu0 %v351
      %v489 = vpop.f32.mrf.mxu0
      %v490 = vadd.f32 %v237, %v489
      %v491 = vpop.f32.mrf.mxu0
      %v492 = vpop.f32.mrf.mxu0
      %v493 = vadd.f32 %v237, %v492
      %v494 = vpop.f32.mrf.mxu0
      %495 = vmatprep.mubr.bf16.mxu0 0
      %496 = vmatmul.mubr.bf16.gmra.mxu0 %v354
      %v497 = vpop.f32.mrf.mxu0
      %v498 = vadd.f32 %v237, %v497
      %v499 = vpop.f32.mrf.mxu0
      %v500 = vpop.f32.mrf.mxu0
      %v501 = vadd.f32 %v237, %v500
      %v502 = vpop.f32.mrf.mxu0
      %503 = vmatprep.mubr.bf16.mxu0 0
      %504 = vmatmul.mubr.bf16.gmra.mxu0 %v357
      %v505 = vpop.f32.mrf.mxu0
      %v506 = vadd.f32 %v237, %v505
      %v507 = vpop.f32.mrf.mxu0
      %v508 = vpop.f32.mrf.mxu0
      %v509 = vadd.f32 %v237, %v508
      %v510 = vpop.f32.mrf.mxu0
      %511 = vmatprep.mubr.bf16.mxu0 0
      %512 = vmatmul.mubr.bf16.gmra.mxu0 %v360
      %v513 = vpop.f32.mrf.mxu0
      %v514 = vadd.f32 %v237, %v513
      %v515 = vpop.f32.mrf.mxu0
      %v516 = vpop.f32.mrf.mxu0
      %v517 = vadd.f32 %v237, %v516
      %v518 = vpop.f32.mrf.mxu0
      %519 = vmatprep.mubr.bf16.mxu0 0
      %520 = vmatmul.mubr.bf16.gmra.mxu0 %v363
      %v521 = vpop.f32.mrf.mxu0
      %v522 = vadd.f32 %v237, %v521
      %v523 = vpop.f32.mrf.mxu0
      %v524 = vpop.f32.mrf.mxu0
      %v525 = vadd.f32 %v237, %v524
      %v526 = vpop.f32.mrf.mxu0
      %527 = vmatprep.mubr.bf16.mxu0 0
      %528 = vmatmul.mubr.bf16.gmra.mxu0 %v366
      %v529 = vpop.f32.mrf.mxu0
      %v530 = vadd.f32 %v237, %v529
      %v531 = vpop.f32.mrf.mxu0
      %v532 = vpop.f32.mrf.mxu0
      %v533 = vadd.f32 %v237, %v532
      %v534 = vpop.f32.mrf.mxu0
      %535 = vdwg.mxu0
      %vm536 = vcmp.ge.f32.partialorder %v410, 0.0
      %vm537 = vcmp.ge.f32.partialorder %v413, 0.0
      %vm538 = vcmp.ge.f32.partialorder %v418, 0.0
      %vm539 = vcmp.ge.f32.partialorder %v421, 0.0
      %vm540 = vcmp.ge.f32.partialorder %v426, 0.0
      %vm541 = vcmp.ge.f32.partialorder %v429, 0.0
      %vm542 = vcmp.ge.f32.partialorder %v434, 0.0
      %vm543 = vcmp.ge.f32.partialorder %v437, 0.0
      %vm544 = vcmp.ge.f32.partialorder %v442, 0.0
      %vm545 = vcmp.ge.f32.partialorder %v445, 0.0
      %vm546 = vcmp.ge.f32.partialorder %v450, 0.0
      %vm547 = vcmp.ge.f32.partialorder %v453, 0.0
      %vm548 = vcmp.ge.f32.partialorder %v458, 0.0
      %vm549 = vcmp.ge.f32.partialorder %v461, 0.0
      %vm550 = vcmp.ge.f32.partialorder %v466, 0.0
      %vm551 = vcmp.ge.f32.partialorder %v469, 0.0
      %vm552 = vcmp.ge.f32.partialorder %v474, 0.0
      %vm553 = vcmp.ge.f32.partialorder %v477, 0.0
      %vm554 = vcmp.ge.f32.partialorder %v482, 0.0
      %vm555 = vcmp.ge.f32.partialorder %v485, 0.0
      %vm556 = vcmp.ge.f32.partialorder %v490, 0.0
      %vm557 = vcmp.ge.f32.partialorder %v493, 0.0
      %vm558 = vcmp.ge.f32.partialorder %v498, 0.0
      %vm559 = vcmp.ge.f32.partialorder %v501, 0.0
      %vm560 = vcmp.ge.f32.partialorder %v506, 0.0
      %vm561 = vcmp.ge.f32.partialorder %v509, 0.0
      %vm562 = vcmp.ge.f32.partialorder %v514, 0.0
      %vm563 = vcmp.ge.f32.partialorder %v517, 0.0
      %vm564 = vcmp.ge.f32.partialorder %v522, 0.0
      %vm565 = vcmp.ge.f32.partialorder %v525, 0.0
      %vm566 = vcmp.ge.f32.partialorder %v530, 0.0
      %vm567 = vcmp.ge.f32.partialorder %v533, 0.0
      %v568 = vmul.f32 %v410, 0.2
      %v569 = vmul.f32 %v413, 0.2
      %v570 = vmul.f32 %v418, 0.2
      %v571 = vmul.f32 %v421, 0.2
      %v572 = vmul.f32 %v426, 0.2
      %v573 = vmul.f32 %v429, 0.2
      %v574 = vmul.f32 %v434, 0.2
      %v575 = vmul.f32 %v437, 0.2
      %v576 = vmul.f32 %v442, 0.2
      %v577 = vmul.f32 %v445, 0.2
      %v578 = vmul.f32 %v450, 0.2
      %v579 = vmul.f32 %v453, 0.2
      %v580 = vmul.f32 %v458, 0.2
      %v581 = vmul.f32 %v461, 0.2
      %v582 = vmul.f32 %v466, 0.2
      %v583 = vmul.f32 %v469, 0.2
      %v584 = vmul.f32 %v474, 0.2
      %v585 = vmul.f32 %v477, 0.2
      %v586 = vmul.f32 %v482, 0.2
      %v587 = vmul.f32 %v485, 0.2
      %v588 = vmul.f32 %v490, 0.2
      %v589 = vmul.f32 %v493, 0.2
      %v590 = vmul.f32 %v498, 0.2
      %v591 = vmul.f32 %v501, 0.2
      %v592 = vmul.f32 %v506, 0.2
      %v593 = vmul.f32 %v509, 0.2
      %v594 = vmul.f32 %v514, 0.2
      %v595 = vmul.f32 %v517, 0.2
      %v596 = vmul.f32 %v522, 0.2
      %v597 = vmul.f32 %v525, 0.2
      %v598 = vmul.f32 %v530, 0.2
      %v599 = vmul.f32 %v533, 0.2
      %v600 = vsel %vm536, %v410, %v568
      %v601 = vsel %vm537, %v413, %v569
      %v602 = vsel %vm538, %v418, %v570
      %v603 = vsel %vm539, %v421, %v571
      %v604 = vsel %vm540, %v426, %v572
      %v605 = vsel %vm541, %v429, %v573
      %v606 = vsel %vm542, %v434, %v574
      %v607 = vsel %vm543, %v437, %v575
      %v608 = vsel %vm544, %v442, %v576
      %v609 = vsel %vm545, %v445, %v577
      %v610 = vsel %vm546, %v450, %v578
      %v611 = vsel %vm547, %v453, %v579
      %v612 = vsel %vm548, %v458, %v580
      %v613 = vsel %vm549, %v461, %v581
      %v614 = vsel %vm550, %v466, %v582
      %v615 = vsel %vm551, %v469, %v583
      %v616 = vsel %vm552, %v474, %v584
      %v617 = vsel %vm553, %v477, %v585
      %v618 = vsel %vm554, %v482, %v586
      %v619 = vsel %vm555, %v485, %v587
      %v620 = vsel %vm556, %v490, %v588
      %v621 = vsel %vm557, %v493, %v589
      %v622 = vsel %vm558, %v498, %v590
      %v623 = vsel %vm559, %v501, %v591
      %v624 = vsel %vm560, %v506, %v592
      %v625 = vsel %vm561, %v509, %v593
      %v626 = vsel %vm562, %v514, %v594
      %v627 = vsel %vm563, %v517, %v595
      %v628 = vsel %vm564, %v522, %v596
      %v629 = vsel %vm565, %v525, %v597
      %v630 = vsel %vm566, %v530, %v598
      %v631 = vsel %vm567, %v533, %v599
      %v632 = vmul.f32 %v600, 1.4142135
      %v633 = vmul.f32 %v601, 1.4142135
      %v634 = vmul.f32 %v602, 1.4142135
      %v635 = vmul.f32 %v603, 1.4142135
      %v636 = vmul.f32 %v604, 1.4142135
      %v637 = vmul.f32 %v605, 1.4142135
      %v638 = vmul.f32 %v606, 1.4142135
      %v639 = vmul.f32 %v607, 1.4142135
      %v640 = vmul.f32 %v608, 1.4142135
      %v641 = vmul.f32 %v609, 1.4142135
      %v642 = vmul.f32 %v610, 1.4142135
      %v643 = vmul.f32 %v611, 1.4142135
      %v644 = vmul.f32 %v612, 1.4142135
      %v645 = vmul.f32 %v613, 1.4142135
      %v646 = vmul.f32 %v614, 1.4142135
      %v647 = vmul.f32 %v615, 1.4142135
      %v648 = vmul.f32 %v616, 1.4142135
      %v649 = vmul.f32 %v617, 1.4142135
      %v650 = vmul.f32 %v618, 1.4142135
      %v651 = vmul.f32 %v619, 1.4142135
      %v652 = vmul.f32 %v620, 1.4142135
      %v653 = vmul.f32 %v621, 1.4142135
      %v654 = vmul.f32 %v622, 1.4142135
      %v655 = vmul.f32 %v623, 1.4142135
      %v656 = vmul.f32 %v624, 1.4142135
      %v657 = vmul.f32 %v625, 1.4142135
      %v658 = vmul.f32 %v626, 1.4142135
      %v659 = vmul.f32 %v627, 1.4142135
      %v660 = vmul.f32 %v628, 1.4142135
      %v661 = vmul.f32 %v629, 1.4142135
      %v662 = vmul.f32 %v630, 1.4142135
      %v663 = vmul.f32 %v631, 1.4142135
      %v664 = vpack.c.bf16 %v633, %v632
      %v665 = vpack.c.bf16 %v635, %v634
      %v666 = vpack.c.bf16 %v637, %v636
      %v667 = vpack.c.bf16 %v639, %v638
      %v668 = vpack.c.bf16 %v641, %v640
      %v669 = vpack.c.bf16 %v643, %v642
      %v670 = vpack.c.bf16 %v645, %v644
      %v671 = vpack.c.bf16 %v647, %v646
      %v672 = vpack.c.bf16 %v649, %v648
      %v673 = vpack.c.bf16 %v651, %v650
      %v674 = vpack.c.bf16 %v653, %v652
      %v675 = vpack.c.bf16 %v655, %v654
      %v676 = vpack.c.bf16 %v657, %v656
      %v677 = vpack.c.bf16 %v659, %v658
      %v678 = vpack.c.bf16 %v661, %v660
      %v679 = vpack.c.bf16 %v663, %v662
      %v696 = vunpack.c.l.b16 %v664
      %v697 = vunpack.c.h.b16 %v664
      %v698 = vunpack.c.l.b16 %v665
      %v699 = vunpack.c.h.b16 %v665
      %v700 = vunpack.c.l.b16 %v666
      %v701 = vunpack.c.h.b16 %v666
      %v702 = vunpack.c.l.b16 %v667
      %v703 = vunpack.c.h.b16 %v667
      %v704 = vunpack.c.l.b16 %v668
      %v705 = vunpack.c.h.b16 %v668
      %v706 = vunpack.c.l.b16 %v669
      %v707 = vunpack.c.h.b16 %v669
      %v708 = vunpack.c.l.b16 %v670
      %v709 = vunpack.c.h.b16 %v670
      %v710 = vunpack.c.l.b16 %v671
      %v711 = vunpack.c.h.b16 %v671
      %v712 = vunpack.c.l.b16 %v672
      %v713 = vunpack.c.h.b16 %v672
      %v714 = vunpack.c.l.b16 %v673
      %v715 = vunpack.c.h.b16 %v673
      %v716 = vunpack.c.l.b16 %v674
      %v717 = vunpack.c.h.b16 %v674
      %v718 = vunpack.c.l.b16 %v675
      %v719 = vunpack.c.h.b16 %v675
      %v720 = vunpack.c.l.b16 %v676
      %v721 = vunpack.c.h.b16 %v676
      %v722 = vunpack.c.l.b16 %v677
      %v723 = vunpack.c.h.b16 %v677
      %v724 = vunpack.c.l.b16 %v678
      %v725 = vunpack.c.h.b16 %v678
      %v726 = vunpack.c.l.b16 %v679
      %v727 = vunpack.c.h.b16 %v679
      %v728 = vpack.c.b16 %v696, %v696
      %v729 = vpack.c.b16 %v697, %v697
      %v730 = vpack.c.b16 %v698, %v698
      %v731 = vpack.c.b16 %v699, %v699
      %v732 = vpack.c.b16 %v700, %v700
      %v733 = vpack.c.b16 %v701, %v701
      %v734 = vpack.c.b16 %v702, %v702
      %v735 = vpack.c.b16 %v703, %v703
      %v736 = vpack.c.b16 %v704, %v704
      %v737 = vpack.c.b16 %v705, %v705
      %v738 = vpack.c.b16 %v706, %v706
      %v739 = vpack.c.b16 %v707, %v707
      %v740 = vpack.c.b16 %v708, %v708
      %v741 = vpack.c.b16 %v709, %v709
      %v742 = vpack.c.b16 %v710, %v710
      %v743 = vpack.c.b16 %v711, %v711
      %v744 = vpack.c.b16 %v712, %v712
      %v745 = vpack.c.b16 %v713, %v713
      %v746 = vpack.c.b16 %v714, %v714
      %v747 = vpack.c.b16 %v715, %v715
      %v748 = vpack.c.b16 %v716, %v716
      %v749 = vpack.c.b16 %v717, %v717
      %v750 = vpack.c.b16 %v718, %v718
      %v751 = vpack.c.b16 %v719, %v719
      %v752 = vpack.c.b16 %v720, %v720
      %v753 = vpack.c.b16 %v721, %v721
      %v754 = vpack.c.b16 %v722, %v722
      %v755 = vpack.c.b16 %v723, %v723
      %v756 = vpack.c.b16 %v724, %v724
      %v757 = vpack.c.b16 %v725, %v725
      %v758 = vpack.c.b16 %v726, %v726
      %v759 = vpack.c.b16 %v727, %v727
      %vm792 = vcmask 257024
      %793 = vst.msk [vmem:[%s192] sm:$0xf] %vm792, %v728
      %794 = vst.msk [vmem:[%s192 + $0x4] sm:$0xf] %vm792, %v729
      %795 = vst.msk [vmem:[%s192 + $0x8] sm:$0xf] %vm792, %v730
      %796 = vst.msk [vmem:[%s192 + $0xc] sm:$0xf] %vm792, %v731
      %797 = vst.msk [vmem:[%s192 + $0x10] sm:$0xf] %vm792, %v732
      %798 = vst.msk [vmem:[%s192 + $0x14] sm:$0xf] %vm792, %v733
      %799 = vst.msk [vmem:[%s192 + $0x18] sm:$0xf] %vm792, %v734
      %800 = vst.msk [vmem:[%s192 + $0x1c] sm:$0xf] %vm792, %v735
      %801 = vst.msk [vmem:[%s192 + $0x20] sm:$0xf] %vm792, %v736
      %802 = vst.msk [vmem:[%s192 + $0x24] sm:$0xf] %vm792, %v737
      %803 = vst.msk [vmem:[%s192 + $0x28] sm:$0xf] %vm792, %v738
      %804 = vst.msk [vmem:[%s192 + $0x2c] sm:$0xf] %vm792, %v739
      %805 = vst.msk [vmem:[%s192 + $0x30] sm:$0xf] %vm792, %v740
      %806 = vst.msk [vmem:[%s192 + $0x34] sm:$0xf] %vm792, %v741
      %807 = vst.msk [vmem:[%s192 + $0x38] sm:$0xf] %vm792, %v742
      %808 = vst.msk [vmem:[%s192 + $0x3c] sm:$0xf] %vm792, %v743
      %809 = vst.msk [vmem:[%s192 + $0x40] sm:$0xf] %vm792, %v744
      %810 = vst.msk [vmem:[%s192 + $0x44] sm:$0xf] %vm792, %v745
      %811 = vst.msk [vmem:[%s192 + $0x48] sm:$0xf] %vm792, %v746
      %812 = vst.msk [vmem:[%s192 + $0x4c] sm:$0xf] %vm792, %v747
      %813 = vst.msk [vmem:[%s192 + $0x50] sm:$0xf] %vm792, %v748
      %814 = vst.msk [vmem:[%s192 + $0x54] sm:$0xf] %vm792, %v749
      %815 = vst.msk [vmem:[%s192 + $0x58] sm:$0xf] %vm792, %v750
      %816 = vst.msk [vmem:[%s192 + $0x5c] sm:$0xf] %vm792, %v751
      %817 = vst.msk [vmem:[%s192 + $0x60] sm:$0xf] %vm792, %v752
      %818 = vst.msk [vmem:[%s192 + $0x64] sm:$0xf] %vm792, %v753
      %819 = vst.msk [vmem:[%s192 + $0x68] sm:$0xf] %vm792, %v754
      %820 = vst.msk [vmem:[%s192 + $0x6c] sm:$0xf] %vm792, %v755
      %821 = vst.msk [vmem:[%s192 + $0x70] sm:$0xf] %vm792, %v756
      %822 = vst.msk [vmem:[%s192 + $0x74] sm:$0xf] %vm792, %v757
      %823 = vst.msk [vmem:[%s192 + $0x78] sm:$0xf] %vm792, %v758
      %824 = vst.msk [vmem:[%s192 + $0x7c] sm:$0xf] %vm792, %v759
      %s825 = smul.u32 32, %s19
      %p826 = scmp.lt.s32.totalorder %s18, 3
      %s827 = scalar_select %p826, %s18, 3
      %p828 = scmp.lt.s32.totalorder %s825, 31
      %s829 = scalar_select %p828, %s825, 31
      %s830 = smul.addr %s827, 32
      %s831 = sadd.s32 %s829, %s830
      %s832 = smul.addr %s831, 4
      %s833 = scalar_lea.vmem %s3, %s832
      // Predicated region
      $region33: #{tpu_custom_call.1} parent=31 // pred_check
        %p834 = pneg %p114
      $region34: #{tpu_custom_call.1} parent=31 // pred_check_branch
        %836 = sbr.rel (%p834) target = $region36
      $region35: #{tpu_custom_call.1} parent=31 // pred_region
        %s837 = smul.u32 32, %s19
      $region36: #{tpu_custom_call.1} parent=31 // pred_fallthru
        _
    $region32: #{tpu_custom_call.1} parent=5 // pred_fallthru
      _
    %p838 = scmp.le.s32.totalorder 2, %s9
    // Predicated region
    $region37: #{tpu_custom_call.1} parent=5 // pred_check
      %p839 = pneg %p838
    $region38: #{tpu_custom_call.1} parent=5 // pred_check_branch
      %841 = sbr.rel (%p839) target = $region40
    $region39: #{tpu_custom_call.1} parent=5 // pred_region
      %s842 = ssub.s32 %s9, 2
      // Predicated region
      $region41: #{tpu_custom_call.1} parent=39 // pred_check
        %p843 = pneg %p120
      $region42: #{tpu_custom_call.1} parent=39 // pred_check_branch
        %845 = sbr.rel (%p843) target = $region44
      $region43: #{tpu_custom_call.1} parent=39 // pred_region
        %s846 = smul.u32 32, %s21
        %p847 = scmp.lt.s32.totalorder %s20, 3
        %s848 = scalar_select %p847, %s20, 3
        %p849 = scmp.lt.s32.totalorder %s846, 31
        %s850 = scalar_select %p849, %s846, 31
        %s851 = smul.addr %s848, 32
        %s852 = sadd.s32 %s850, %s851
        %s853 = smul.addr %s852, 4
        %s854 = scalar_lea.vmem %s3, %s853
      $region44: #{tpu_custom_call.1} parent=39 // pred_fallthru
        _
    $region40: #{tpu_custom_call.1} parent=5 // pred_fallthru
      _
  $region6: #{tpu_custom_call.1} parent=0 // loop_footer
    %s13 = sadd.s32 1, %s9
  $region7: #{tpu_custom_call.1} parent=0 // loop_footer_branch
    %8 = sbr.rel target = $region3
  $region8: #{tpu_custom_call.1} parent=0 // loop_exit
    _

</llo_original>
